<compile_context>
chip_gen: v7x
topology: tpu7x:2x2x1
jax: 0.10.0
libtpu: 0.0.40
codegen_flags: <defaults>
</compile_context>

<pallas_src>
import functools

import numpy as np
import jax
import jax.numpy as jnp
from jax import lax
from jax.experimental import pallas as pl
from jax.experimental.pallas import tpu as pltpu

LEAKY_SLOPE = 0.1


def _leaky(x):
    # max(x, 0.1*x): valid because slope < 1; mul+max instead of cmp+mul+select.
    return jnp.maximum(x, LEAKY_SLOPE * x)


@functools.lru_cache(maxsize=None)
def _roll_is_like_jnp_roll():
    """One-time probe of pltpu.roll's rotation direction.

    The kernel needs out[j] = x[(j + s) mod L]; depending on the rotate
    convention that is shift = (-s) % L or shift = s % L.  A tiny probe kernel
    settles it once per process so the main kernel is correct either way.
    """
    def probe(x_ref, o_ref):
        o_ref[...] = pltpu.roll(x_ref[...], shift=1, axis=1)

    x = np.arange(8 * 128, dtype=np.float32).reshape(8, 128)
    out = pl.pallas_call(
        probe, out_shape=jax.ShapeDtypeStruct((8, 128), jnp.float32))(x)
    return bool(np.allclose(np.asarray(out), np.roll(x, 1, axis=1)))


# ---------------------------------------------------------------------------
# Fused DoubleConv kernel (nb images, lane-stacked, per grid step)
# ---------------------------------------------------------------------------
def _double_conv_kernel(x_ref, w1_ref, b1_ref, w2_ref, b2_ref, mask_ref,
                        o_ref, taps1_ref, taps2_ref, *,
                        W, dilation, roll_like_jnp):
    """Refs (L = nb*H*W lanes; nb images stacked along the lane axis):
      x_ref    : (1, Cin, L)     f32  input images
      w1_ref   : (Cout, 9*Cin)   bf16 conv1 weights, tap-major, BN1 scale folded
      b1_ref   : (Cout, 1)       f32  BN1 bias
      w2_ref   : (Cout, 9*Cout)  bf16 conv2 weights, tap-major, BN2 scale folded
      b2_ref   : (Cout, 1)       f32  BN2 bias
      mask_ref : (9, 1, L)       f32  per-tap source-pixel validity mask
      o_ref    : (1, Cout, L)    f32  output (lane-dense)
      taps1_ref: (9*Cin, L)      f32  scratch: stacked im2col taps for conv1
      taps2_ref: (9*Cout, L)     f32  scratch: stacked im2col taps for conv2
    """
    L = o_ref.shape[2]

    def stack_taps(xv, taps_ref):
        # Build the (9*C, L) im2col operand: tap t = kh*3 + kw lives in rows
        # [t*C, (t+1)*C).  Shifts are lane rotations (XLU); rolled-in garbage
        # (out-of-image / cross-image / wrap-around) is killed by the
        # precomputed validity mask, so no zero halo is needed anywhere.
        C = xv.shape[0]
        t = 0
        for kh in range(3):
            for kw in range(3):
                s = (kh - 1) * dilation * W + (kw - 1) * dilation
                if s == 0:
                    xs = xv                                  # centre tap
                else:
                    shift = (-s) % L if roll_like_jnp else s % L
                    xs = pltpu.roll(xv, shift=shift, axis=1) * mask_ref[t]
                taps_ref[t * C:(t + 1) * C, :] = xs
                t += 1

    # conv1 (BN1 scale folded into w1) -> bias -> DropBlock(=id) -> LeakyReLU
    stack_taps(x_ref[0], taps1_ref)
    h1 = jnp.dot(w1_ref[...], taps1_ref[...].astype(jnp.bfloat16),
                 preferred_element_type=jnp.float32)
    x1 = _leaky(h1 + b1_ref[...])                            # (Cout, L), stays on-chip

    # conv2 (BN2 scale folded into w2) -> bias -> DropBlock(=id) -> LeakyReLU
    stack_taps(x1, taps2_ref)
    h2 = jnp.dot(w2_ref[...], taps2_ref[...].astype(jnp.bfloat16),
                 preferred_element_type=jnp.float32)
    x2 = _leaky(h2 + b2_ref[...])

    # residual add + final LeakyReLU (full-width, lane-dense store)
    o_ref[0] = _leaky(x2 + x1)


# ---------------------------------------------------------------------------
# Host-side helpers / wrapper
# ---------------------------------------------------------------------------
def _tap_masks(H, W, dilation, nb):
    """mask[t, 0, i*HW + h*W + w] == 1 iff the source pixel (h+dh, w+dw) of tap
    t lies inside the image.  Tiled nb times to match the lane-stacked layout;
    also guards against roll wrap-around and cross-image bleed."""
    hh, ww = np.meshgrid(np.arange(H), np.arange(W), indexing="ij")
    base = np.zeros((9, 1, H * W), np.float32)
    t = 0
    for kh in range(3):
        for kw in range(3):
            dh, dw = (kh - 1) * dilation, (kw - 1) * dilation
            ok = ((hh + dh >= 0) & (hh + dh < H) &
                  (ww + dw >= 0) & (ww + dw < W))
            base[t, 0] = ok.reshape(-1).astype(np.float32)
            t += 1
    return jnp.asarray(np.tile(base, (1, 1, nb)))


def _images_per_step(N, HW):
    """Largest divisor of N that (a) keeps the grid >= 2 steps so both v7x
    TensorCores get work and (b) caps the lane width at 8192 lanes for VMEM
    headroom (v7x has only 64 MiB).  Falls back to 1 image per step."""
    cap = max(1, 8192 // HW)
    for cand in range(min(N, cap), 0, -1):
        if N % cand == 0 and N // cand >= 2:
            return cand
    return 1


def double_conv_forward(params, x, dilation):
    """DoubleConv forward (eval mode).  x: (N, Cin, H, W) f32 -> (N, Cout, H, W)."""
    return _double_conv_impl(params, x, dilation, _roll_is_like_jnp_roll())


@functools.partial(jax.jit, static_argnames=("dilation", "roll_like_jnp"))
def _double_conv_impl(params, x, dilation, roll_like_jnp):
    N, Cin, H, W = x.shape
    Cout = params["b1"].shape[0]
    HW = H * W
    nb = _images_per_step(N, HW)          # images per grid step
    G = N // nb                           # grid length (>= 2 when N >= 2)
    L = nb * HW

    # lane-stack nb images per step: (N, Cin, H, W) -> (G, Cin, nb*HW)
    x_st = (x.astype(jnp.float32).reshape(G, nb, Cin, HW)
            .transpose(0, 2, 1, 3).reshape(G, Cin, L))
    masks = _tap_masks(H, W, dilation, nb)

    kernel = functools.partial(_double_conv_kernel, W=W, dilation=dilation,
                               roll_like_jnp=roll_like_jnp)

    out = pl.pallas_call(
        kernel,
        out_shape=jax.ShapeDtypeStruct((G, Cout, L), jnp.float32),
        grid=(G,),
        in_specs=[
            pl.BlockSpec((1, Cin, L), lambda g: (g, 0, 0)),     # nb images
            pl.BlockSpec((Cout, 9 * Cin), lambda g: (0, 0)),    # w1 (bf16)
            pl.BlockSpec((Cout, 1), lambda g: (0, 0)),          # b1
            pl.BlockSpec((Cout, 9 * Cout), lambda g: (0, 0)),   # w2 (bf16)
            pl.BlockSpec((Cout, 1), lambda g: (0, 0)),          # b2
            pl.BlockSpec((9, 1, L), lambda g: (0, 0, 0)),       # tap masks
        ],
        out_specs=pl.BlockSpec((1, Cout, L), lambda g: (g, 0, 0)),
        scratch_shapes=[pltpu.VMEM((9 * Cin, L), jnp.float32),
                        pltpu.VMEM((9 * Cout, L), jnp.float32)],
        compiler_params=pltpu.CompilerParams(
            dimension_semantics=("parallel",)),                 # feeds both v7x TCs
    )(x_st, params["w1"], params["b1"], params["w2"], params["b2"], masks)

    return (out.reshape(G, Cout, nb, HW).transpose(0, 2, 1, 3)
            .reshape(N, Cout, H, W))


# ---------------------------------------------------------------------------
# Deterministic synthetic parameters (Conv weights + eval-mode BatchNorm stats)
# ---------------------------------------------------------------------------
def init_double_conv(key, in_channels, out_channels):
    """Returns (kernel_params, ref_params).

    kernel_params: TPU layout — (Cout, 9*Cin) tap-major weights with BN scale
    folded in (bf16) plus (Cout, 1) f32 biases.
    ref_params: raw f32 PyTorch-layout tensors for the pure-JAX reference.
    """
    k = jax.random.split(key, 4)

    def bn_stats(kk, c):
        kg, kb, km, kv = jax.random.split(kk, 4)
        gamma = 1.0 + 0.1 * jax.random.normal(kg, (c,), jnp.float32)
        beta = 0.1 * jax.random.normal(kb, (c,), jnp.float32)
        mean = 0.1 * jax.random.normal(km, (c,), jnp.float32)
        var = 1.0 + 0.1 * jax.random.uniform(kv, (c,), jnp.float32)
        scale = gamma * lax.rsqrt(var + 1e-5)
        bias = beta - mean * scale
        return scale, bias

    w1 = jax.random.normal(k[0], (out_channels, in_channels, 3, 3),
                           jnp.float32) / np.sqrt(9.0 * in_channels)
    w2 = jax.random.normal(k[1], (out_channels, out_channels, 3, 3),
                           jnp.float32) / np.sqrt(9.0 * out_channels)
    s1, b1 = bn_stats(k[2], out_channels)
    s2, b2 = bn_stats(k[3], out_channels)

    def fold(w, scale):
        # (Cout, Cin, kh, kw) -> (Cout, 9*Cin) with contraction index
        # t*Cin + c, t = kh*3 + kw (matches stack_taps row order); BN scale
        # folded per output channel; bf16 for the MXU.
        co, ci = w.shape[0], w.shape[1]
        flat = jnp.transpose(w, (0, 2, 3, 1)).reshape(co, 9 * ci)
        return (flat * scale[:, None]).astype(jnp.bfloat16)

    kernel_params = {
        "w1": fold(w1, s1), "b1": b1.reshape(-1, 1).astype(jnp.float32),
        "w2": fold(w2, s2), "b2": b2.reshape(-1, 1).astype(jnp.float32),
    }
    ref_params = {"w1": w1, "s1": s1, "b1": b1, "w2": w2, "s2": s2, "b2": b2}
    return kernel_params, ref_params


# ---------------------------------------------------------------------------
# Pure-JAX reference (matches the PyTorch eval() forward)
# ---------------------------------------------------------------------------
def double_conv_reference(ref_params, x, dilation):
    def conv_bn_act(inp, w, scale, bias):
        y = lax.conv_general_dilated(
            inp, w, window_strides=(1, 1),
            padding=((dilation, dilation), (dilation, dilation)),
            rhs_dilation=(dilation, dilation),
            dimension_numbers=("NCHW", "OIHW", "NCHW"),
            precision=lax.Precision.HIGHEST)
        y = y * scale[None, :, None, None] + bias[None, :, None, None]
        return _leaky(y)

    x1 = conv_bn_act(x, ref_params["w1"], ref_params["s1"], ref_params["b1"])
    x2 = conv_bn_act(x1, ref_params["w2"], ref_params["s2"], ref_params["b2"])
    return _leaky(x2 + x1)


if __name__ == "__main__":
    configs = [
        # (batch, in_channels, out_channels, H, W, dilation)
        (4, 4, 8, 16, 16, 1),     # 2 images lane-stacked per step, grid = 2
        (2, 8, 16, 16, 16, 2),    # 1 image per step, grid = 2
    ]
    root = jax.random.PRNGKey(0)
    for i, (N, Cin, Cout, H, W, dil) in enumerate(configs):
        kx, kp = jax.random.split(jax.random.fold_in(root, i))
        x = jax.random.normal(kx, (N, Cin, H, W), jnp.float32)
        kernel_params, ref_params = init_double_conv(kp, Cin, Cout)

        out = jax.block_until_ready(
            double_conv_forward(kernel_params, x, dilation=dil))
        assert out.shape == (N, Cout, H, W), out.shape
        assert bool(jnp.all(jnp.isfinite(out)))

        # correctness vs. f32 XLA reference (loose tolerance: bf16 MXU operands)
        ref = double_conv_reference(ref_params, x, dil)
        np.testing.assert_allclose(np.asarray(out), np.asarray(ref),
                                   rtol=6e-2, atol=6e-2)
    print("KERNEL_OK")
</pallas_src>

<mosaic_0001>
module attributes {stable_mosaic.version = 11 : i64} {
  func.func @probe(%arg0: memref<8x128xf32, #tpu.memory_space<vmem>>, %arg1: memref<8x128xf32, #tpu.memory_space<vmem>>) attributes {dimension_semantics = [], scalar_prefetch = 0 : i64, scratch_operands = 0 : i64, tpu.core_type = #tpu.core_type<tc>} {
    %c0 = arith.constant 0 : index
    %c0_0 = arith.constant 0 : index
    %0 = vector.load %arg0[%c0, %c0_0] : memref<8x128xf32, #tpu.memory_space<vmem>>, vector<8x128xf32>
    %c1_i32 = arith.constant 1 : i32
    %1 = tpu.dynamic_rotate %0 by %c1_i32 dim 1 : vector<8x128xf32>, i32 -> vector<8x128xf32>
    %c0_1 = arith.constant 0 : index
    %c0_2 = arith.constant 0 : index
    %2 = vector.load %arg1[%c0_1, %c0_2] : memref<8x128xf32, #tpu.memory_space<vmem>>, vector<8x128xf32>
    tpu.vector_store %arg1[%c0_1, %c0_2], %1 {strides = array<i32>} : memref<8x128xf32, #tpu.memory_space<vmem>>, vector<8x128xf32>,
    return
  }
}

</mosaic_0001>

<llo_original>
// kernel: tpu_custom_call.1
$region0: #{tpu_custom_call.1}
  #allocation0 [shape = 'u32[]', space=smem, size = 0x4, offset = 0x4, fixed_abs, tag = 'smem constant byte address 0x4 - core index']
  #allocation1 [shape = 'u32[144,128]{1,0:T(1,128)}', space=vmem, size = 0x12000, scoped, tag = 'internal scratch']
  %s0 = inlined_call_operand.hbm [shape: f32[8,128], index: 0, kind: input, shape index: {}]
  %s1 = inlined_call_operand.hbm [shape: f32[8,128], index: 1, kind: output, shape index: {}]
  %s2 = sld [smem:[#allocation0]]
  $region18: #{tpu_custom_call.1} parent=0
    _
  %s4 = ssub.s32 1, %s2
  %s5 = scalar_select 0, %s4, %s2
  $region1: #{tpu_custom_call.1} parent=0
    #allocation2 [shape = 'u8[4096]{0}', space=vmem, size = 0x1000, scoped, tag = 'input window, operand 0, single buffered']
    #allocation3 [shape = 's32[1]{0}', space=sflag, size = 0x4, scoped, tag = 'scoped memory for tpu_custom_call.1']
    #allocation4 [shape = 's32[1]{0}', space=sflag, size = 0x4, scoped, tag = 'scoped memory for tpu_custom_call.1']
    #allocation5 [shape = 'u8[4096]{0}', space=vmem, size = 0x1000, scoped, tag = 'output window, operand 0, single buffered']
    %6 = vsyncpa [#allocation3], 0
    %7 = vsyncpa [#allocation4], 0
    // Predicated region
    $region2: #{tpu_custom_call.1} parent=1 // pred_check
      _
    $region3: #{tpu_custom_call.1} parent=1 // pred_check_branch
      %9 = sbr.rel (0) target = $region5
    $region4: #{tpu_custom_call.1} parent=1 // pred_region
      %s11 = ssub.s32 128, 128
      %12 = vsyncadd [#allocation3], %s11
      %s14 = sshll.u32 [#allocation2], 4
      %s15 = int_to_ptr.vmem [resolvable:$true] %s14
      %17 = dma.hbm_to_vmem [thread:$0]  %s0, 128, %s15, [#allocation3]
    $region5: #{tpu_custom_call.1} parent=1 // pred_fallthru
      _
    // Predicated region
    $region6: #{tpu_custom_call.1} parent=1 // pred_check
      _
    $region7: #{tpu_custom_call.1} parent=1 // pred_check_branch
      %19 = sbr.rel (0) target = $region9
    $region8: #{tpu_custom_call.1} parent=1 // pred_region
      %20 = dma.done [#allocation3], 128
    $region9: #{tpu_custom_call.1} parent=1 // pred_fallthru
      _
    %v21 = vld [vmem:[#allocation2] sm:$0xff]
    %22 = vrot.lane.b32.xlu0 %v21, 1
    %v23 = vpop.permute.xlu0 %22
    %24 = vst [vmem:[#allocation5] sm:$0xff] %v23
    // Predicated region
    $region10: #{tpu_custom_call.1} parent=1 // pred_check
      _
    $region11: #{tpu_custom_call.1} parent=1 // pred_check_branch
      %26 = sbr.rel (0) target = $region13
    $region12: #{tpu_custom_call.1} parent=1 // pred_region
      %s28 = ssub.s32 128, 128
      %29 = vsyncadd [#allocation4], %s28
      %s31 = sshll.u32 [#allocation5], 4
      %s32 = int_to_ptr.vmem [resolvable:$true] %s31
      %34 = dma.vmem_to_hbm [thread:$0]  %s32, 128, %s1, [#allocation4]
    $region13: #{tpu_custom_call.1} parent=1 // pred_fallthru
      _
    // Predicated region
    $region14: #{tpu_custom_call.1} parent=1 // pred_check
      _
    $region15: #{tpu_custom_call.1} parent=1 // pred_check_branch
      %36 = sbr.rel (0) target = $region17
    $region16: #{tpu_custom_call.1} parent=1 // pred_region
      %37 = dma.done [#allocation4], 128
    $region17: #{tpu_custom_call.1} parent=1 // pred_fallthru
      _
    %38 = vsyncpa [#allocation3], 1
    %39 = vsyncpa [#allocation4], 1

</llo_original>
